<compile_context>
chip_gen: v5e
topology: v5e:2x2
jax: 0.10.0
libtpu: 0.0.40
codegen_flags: <defaults>
</compile_context>

<pallas_src>
import functools

import jax
import jax.numpy as jnp
from jax.experimental import pallas as pl
from jax.experimental.pallas import tpu as pltpu

LANE = 128


def _round_up(x, m):
    return (x + m - 1) // m * m


def critic_kernel(s_ref, a_ref, w1s_ref, w1a_ref, b1_ref, w2_ref, b2_ref,
                  w3_ref, b3_ref, o_ref):
    # Fused concat: x @ W1 == state @ W1[:S] + action @ W1[S:]
    h1 = (jnp.dot(s_ref[...], w1s_ref[...], preferred_element_type=jnp.float32)
          + jnp.dot(a_ref[...], w1a_ref[...], preferred_element_type=jnp.float32)
          + b1_ref[...])
    h1 = jnp.maximum(h1, 0.0)

    # l2 + ReLU (128-lane-dense MXU matmul, f32 accumulate)
    h2 = jnp.dot(h1, w2_ref[...], preferred_element_type=jnp.float32) + b2_ref[...]
    h2 = jnp.maximum(h2, 0.0)

    # l3: 1-wide output -> VPU multiply + lane reduction (avoids a 1-column
    # MXU pass). w3_ref is a (1, HP) row vector, broadcasts along sublanes.
    out = jnp.sum(h2 * w3_ref[...], axis=-1, keepdims=True) + b3_ref[...]
    o_ref[...] = out.astype(o_ref.dtype)


def prepare_critic_params(params, state_dim):
    """One-time weight prep for the kernel.

    Splits W1 into state/action halves (fused concat) and zero-pads the hidden
    dimension up to 128 lanes. Zero padding is numerically exact through ReLU
    and the final reduction.
    """
    w1, b1, w2, b2, w3, b3 = params
    in_dim, hidden = w1.shape
    hp = _round_up(hidden, LANE)
    ph = hp - hidden

    w1p = jnp.pad(w1, ((0, 0), (0, ph)))
    w1s = w1p[:state_dim]          # (state_dim, HP)
    w1a = w1p[state_dim:]          # (action_dim, HP)
    b1p = jnp.pad(b1, ((0, 0), (0, ph)))           # (1, HP)
    w2p = jnp.pad(w2, ((0, ph), (0, ph)))          # (HP, HP)
    b2p = jnp.pad(b2, ((0, 0), (0, ph)))           # (1, HP)
    w3p = jnp.pad(w3.reshape(1, hidden), ((0, 0), (0, ph)))  # (1, HP) row
    return (w1s, w1a, b1p, w2p, b2p, w3p, b3)


@functools.partial(jax.jit, static_argnames=("block_b",))
def critic_forward(state, action, kernel_params, *, block_b=1024):
    """state: (B, state_dim), action: (B, action_dim) -> (B, 1)."""
    w1s, w1a, b1, w2, b2, w3, b3 = kernel_params
    B, state_dim = state.shape
    action_dim = action.shape[1]

    # Batch tile: multiple of 8 sublanes, capped by (padded) batch.
    tb = min(block_b, _round_up(B, 8))
    Bp = _round_up(B, tb)
    if Bp != B:
        pad = Bp - B
        state = jnp.pad(state, ((0, pad), (0, 0)))
        action = jnp.pad(action, ((0, pad), (0, 0)))

    grid = (Bp // tb,)

    def resident(shape):
        # Weights/biases: same block every grid step -> stay in VMEM.
        return pl.BlockSpec(shape, lambda i: (0, 0))

    out = pl.pallas_call(
        critic_kernel,
        out_shape=jax.ShapeDtypeStruct((Bp, 1), jnp.float32),
        grid=grid,
        in_specs=[
            pl.BlockSpec((tb, state_dim), lambda i: (i, 0)),
            pl.BlockSpec((tb, action_dim), lambda i: (i, 0)),
            resident(w1s.shape),
            resident(w1a.shape),
            resident(b1.shape),
            resident(w2.shape),
            resident(b2.shape),
            resident(w3.shape),
            resident(b3.shape),
        ],
        out_specs=pl.BlockSpec((tb, 1), lambda i: (i, 0)),
        compiler_params=pltpu.CompilerParams(
            dimension_semantics=("parallel",),
        ),
    )(state, action, w1s, w1a, b1, w2, b2, w3, b3)

    return out[:B] if Bp != B else out


def init_critic_params(key, state_dim, action_dim, hidden_dim):
    """Deterministic init mimicking nn.Linear's U(-1/sqrt(fan_in), +1/sqrt(fan_in)).

    Weights stored (in_features, out_features); biases (1, out_features), so
    x @ W + b matches PyTorch's x @ W_pt.T + b.
    """
    in_dim = state_dim + action_dim
    k = jax.random.split(key, 6)

    def uniform(rng, shape, fan_in):
        bound = 1.0 / jnp.sqrt(jnp.float32(fan_in))
        return jax.random.uniform(rng, shape, jnp.float32, -bound, bound)

    w1 = uniform(k[0], (in_dim, hidden_dim), in_dim)
    b1 = uniform(k[1], (1, hidden_dim), in_dim)
    w2 = uniform(k[2], (hidden_dim, hidden_dim), hidden_dim)
    b2 = uniform(k[3], (1, hidden_dim), hidden_dim)
    w3 = uniform(k[4], (hidden_dim, 1), hidden_dim)
    b3 = uniform(k[5], (1, 1), hidden_dim)
    return (w1, b1, w2, b2, w3, b3)


def critic_reference(state, action, params):
    """Pure-JAX reference for correctness check (unpadded params)."""
    w1, b1, w2, b2, w3, b3 = params
    x = jnp.concatenate([state, action], axis=-1)
    x = jnp.maximum(x @ w1 + b1, 0.0)
    x = jnp.maximum(x @ w2 + b2, 0.0)
    return x @ w3 + b3


if __name__ == "__main__":
    # Small shapes consistent with the module's forward.
    batch, state_dim, action_dim, hidden_dim = 8, 12, 4, 32

    key = jax.random.PRNGKey(0)
    k_state, k_action, k_params = jax.random.split(key, 3)

    state = jax.random.normal(k_state, (batch, state_dim), jnp.float32)
    action = jax.random.normal(k_action, (batch, action_dim), jnp.float32)
    params = init_critic_params(k_params, state_dim, action_dim, hidden_dim)

    # One-time weight prep (split W1 for fused concat, pad hidden -> 128).
    kernel_params = prepare_critic_params(params, state_dim)

    out = critic_forward(state, action, kernel_params)
    out = jax.block_until_ready(out)

    ref = critic_reference(state, action, params)
    assert out.shape == (batch, 1), out.shape
    assert jnp.allclose(out, ref, atol=1e-5, rtol=1e-5), (out, ref)

    print("KERNEL_OK")
</pallas_src>

<mosaic_0001>
module attributes {stable_mosaic.version = 11 : i64} {
  func.func @critic_kernel(%arg0: i32, %arg1: memref<8x12xf32, #tpu.memory_space<vmem>>, %arg2: memref<8x4xf32, #tpu.memory_space<vmem>>, %arg3: memref<12x128xf32, #tpu.memory_space<vmem>>, %arg4: memref<4x128xf32, #tpu.memory_space<vmem>>, %arg5: memref<1x128xf32, #tpu.memory_space<vmem>>, %arg6: memref<128x128xf32, #tpu.memory_space<vmem>>, %arg7: memref<1x128xf32, #tpu.memory_space<vmem>>, %arg8: memref<1x128xf32, #tpu.memory_space<vmem>>, %arg9: memref<1x1xf32, #tpu.memory_space<vmem>>, %arg10: memref<8x1xf32, #tpu.memory_space<vmem>>) attributes {dimension_semantics = [#tpu.dimension_semantics<parallel>], iteration_bounds = array<i64: 1>, scalar_prefetch = 0 : i64, scratch_operands = 0 : i64, tpu.core_type = #tpu.core_type<tc>, window_params = [{transform_indices = @transform_0, window_bounds = array<i64: 8, 12>}, {transform_indices = @transform_1, window_bounds = array<i64: 8, 4>}, {pipeline_mode = #tpu.pipeline_mode<synchronous>, transform_indices = @transform_2, window_bounds = array<i64: 12, 128>}, {pipeline_mode = #tpu.pipeline_mode<synchronous>, transform_indices = @transform_3, window_bounds = array<i64: 4, 128>}, {pipeline_mode = #tpu.pipeline_mode<synchronous>, transform_indices = @transform_4, window_bounds = array<i64: 1, 128>}, {pipeline_mode = #tpu.pipeline_mode<synchronous>, transform_indices = @transform_5, window_bounds = array<i64: 128, 128>}, {pipeline_mode = #tpu.pipeline_mode<synchronous>, transform_indices = @transform_6, window_bounds = array<i64: 1, 128>}, {pipeline_mode = #tpu.pipeline_mode<synchronous>, transform_indices = @transform_7, window_bounds = array<i64: 1, 128>}, {pipeline_mode = #tpu.pipeline_mode<synchronous>, transform_indices = @transform_8, window_bounds = array<i64: 1, 1>}, {transform_indices = @transform_9, window_bounds = array<i64: 8, 1>}]} {
    %c0 = arith.constant 0 : index
    %c0_0 = arith.constant 0 : index
    %0 = vector.load %arg1[%c0, %c0_0] : memref<8x12xf32, #tpu.memory_space<vmem>>, vector<8x12xf32>
    %c0_1 = arith.constant 0 : index
    %c0_2 = arith.constant 0 : index
    %1 = vector.load %arg3[%c0_1, %c0_2] : memref<12x128xf32, #tpu.memory_space<vmem>>, vector<12x128xf32>
    %cst = arith.constant dense<0.000000e+00> : vector<8x128xf32>
    %2 = tpu.matmul %0, %1, %cst {dimension_numbers = #tpu.dot_dimension_numbers<[1], [0], [0], [1], [0, 0, 1, 1], [], []>} : vector<8x12xf32>, vector<12x128xf32>, vector<8x128xf32> -> vector<8x128xf32>
    %c0_3 = arith.constant 0 : index
    %c0_4 = arith.constant 0 : index
    %3 = vector.load %arg2[%c0_3, %c0_4] : memref<8x4xf32, #tpu.memory_space<vmem>>, vector<8x4xf32>
    %c0_5 = arith.constant 0 : index
    %c0_6 = arith.constant 0 : index
    %4 = vector.load %arg4[%c0_5, %c0_6] : memref<4x128xf32, #tpu.memory_space<vmem>>, vector<4x128xf32>
    %cst_7 = arith.constant dense<0.000000e+00> : vector<8x128xf32>
    %5 = tpu.matmul %3, %4, %cst_7 {dimension_numbers = #tpu.dot_dimension_numbers<[1], [0], [0], [1], [0, 0, 1, 1], [], []>} : vector<8x4xf32>, vector<4x128xf32>, vector<8x128xf32> -> vector<8x128xf32>
    %6 = arith.addf %2, %5 : vector<8x128xf32>
    %c0_8 = arith.constant 0 : index
    %c0_9 = arith.constant 0 : index
    %7 = vector.load %arg5[%c0_8, %c0_9] : memref<1x128xf32, #tpu.memory_space<vmem>>, vector<1x128xf32>
    %8 = vector.broadcast %7 : vector<1x128xf32> to vector<8x128xf32>
    %9 = arith.addf %6, %8 : vector<8x128xf32>
    %cst_10 = arith.constant 0.000000e+00 : f32
    %10 = vector.broadcast %cst_10 : f32 to vector<8x128xf32>
    %11 = arith.maximumf %9, %10 : vector<8x128xf32>
    %c0_11 = arith.constant 0 : index
    %c0_12 = arith.constant 0 : index
    %12 = vector.load %arg6[%c0_11, %c0_12] : memref<128x128xf32, #tpu.memory_space<vmem>>, vector<128x128xf32>
    %cst_13 = arith.constant dense<0.000000e+00> : vector<8x128xf32>
    %13 = tpu.matmul %11, %12, %cst_13 {dimension_numbers = #tpu.dot_dimension_numbers<[1], [0], [0], [1], [0, 0, 1, 1], [], []>} : vector<8x128xf32>, vector<128x128xf32>, vector<8x128xf32> -> vector<8x128xf32>
    %c0_14 = arith.constant 0 : index
    %c0_15 = arith.constant 0 : index
    %14 = vector.load %arg7[%c0_14, %c0_15] : memref<1x128xf32, #tpu.memory_space<vmem>>, vector<1x128xf32>
    %15 = vector.broadcast %14 : vector<1x128xf32> to vector<8x128xf32>
    %16 = arith.addf %13, %15 : vector<8x128xf32>
    %cst_16 = arith.constant 0.000000e+00 : f32
    %17 = vector.broadcast %cst_16 : f32 to vector<8x128xf32>
    %18 = arith.maximumf %16, %17 : vector<8x128xf32>
    %c0_17 = arith.constant 0 : index
    %c0_18 = arith.constant 0 : index
    %19 = vector.load %arg8[%c0_17, %c0_18] : memref<1x128xf32, #tpu.memory_space<vmem>>, vector<1x128xf32>
    %20 = vector.broadcast %19 : vector<1x128xf32> to vector<8x128xf32>
    %21 = arith.mulf %18, %20 : vector<8x128xf32>
    %cst_19 = arith.constant dense<0.000000e+00> : vector<8xf32>
    %22 = vector.multi_reduction <add>, %21, %cst_19 [1] : vector<8x128xf32> to vector<8xf32>
    %23 = vector.shape_cast %22 : vector<8xf32> to vector<8x1xf32>
    %c0_20 = arith.constant 0 : index
    %c0_21 = arith.constant 0 : index
    %24 = vector.load %arg9[%c0_20, %c0_21] : memref<1x1xf32, #tpu.memory_space<vmem>>, vector<1x1xf32>
    %25 = vector.broadcast %24 : vector<1x1xf32> to vector<8x1xf32>
    %26 = arith.addf %23, %25 : vector<8x1xf32>
    %c0_22 = arith.constant 0 : index
    %c0_23 = arith.constant 0 : index
    %27 = vector.load %arg10[%c0_22, %c0_23] : memref<8x1xf32, #tpu.memory_space<vmem>>, vector<8x1xf32>
    tpu.vector_store %arg10[%c0_22, %c0_23], %26 {strides = array<i32>} : memref<8x1xf32, #tpu.memory_space<vmem>>, vector<8x1xf32>,
    return
  }
  func.func @transform_0(%arg0: i32) -> (i32, i32) {
    %c0_i32 = arith.constant 0 : i32
    %c0_i32_0 = arith.constant 0 : i32
    return %arg0, %c0_i32 : i32, i32
  }
  func.func @transform_1(%arg0: i32) -> (i32, i32) {
    %c0_i32 = arith.constant 0 : i32
    %c0_i32_0 = arith.constant 0 : i32
    return %arg0, %c0_i32 : i32, i32
  }
  func.func @transform_2(%arg0: i32) -> (i32, i32) {
    %c0_i32 = arith.constant 0 : i32
    %c0_i32_0 = arith.constant 0 : i32
    %c0_i32_1 = arith.constant 0 : i32
    return %c0_i32, %c0_i32_0 : i32, i32
  }
  func.func @transform_3(%arg0: i32) -> (i32, i32) {
    %c0_i32 = arith.constant 0 : i32
    %c0_i32_0 = arith.constant 0 : i32
    %c0_i32_1 = arith.constant 0 : i32
    return %c0_i32, %c0_i32_0 : i32, i32
  }
  func.func @transform_4(%arg0: i32) -> (i32, i32) {
    %c0_i32 = arith.constant 0 : i32
    %c0_i32_0 = arith.constant 0 : i32
    %c0_i32_1 = arith.constant 0 : i32
    return %c0_i32, %c0_i32_0 : i32, i32
  }
  func.func @transform_5(%arg0: i32) -> (i32, i32) {
    %c0_i32 = arith.constant 0 : i32
    %c0_i32_0 = arith.constant 0 : i32
    %c0_i32_1 = arith.constant 0 : i32
    return %c0_i32, %c0_i32_0 : i32, i32
  }
  func.func @transform_6(%arg0: i32) -> (i32, i32) {
    %c0_i32 = arith.constant 0 : i32
    %c0_i32_0 = arith.constant 0 : i32
    %c0_i32_1 = arith.constant 0 : i32
    return %c0_i32, %c0_i32_0 : i32, i32
  }
  func.func @transform_7(%arg0: i32) -> (i32, i32) {
    %c0_i32 = arith.constant 0 : i32
    %c0_i32_0 = arith.constant 0 : i32
    %c0_i32_1 = arith.constant 0 : i32
    return %c0_i32, %c0_i32_0 : i32, i32
  }
  func.func @transform_8(%arg0: i32) -> (i32, i32) {
    %c0_i32 = arith.constant 0 : i32
    %c0_i32_0 = arith.constant 0 : i32
    %c0_i32_1 = arith.constant 0 : i32
    return %c0_i32, %c0_i32_0 : i32, i32
  }
  func.func @transform_9(%arg0: i32) -> (i32, i32) {
    %c0_i32 = arith.constant 0 : i32
    %c0_i32_0 = arith.constant 0 : i32
    return %arg0, %c0_i32 : i32, i32
  }
}

</mosaic_0001>

<llo_original>
// kernel: critic_forward.1
$region0: #{critic_forward.1}
  #allocation0 [shape = 'u32[]', space=smem, size = 0x4, offset = 0x4, fixed_abs, tag = 'smem constant byte address 0x4 - core index']
  #allocation1 [shape = 'u32[72,128]{1,0:T(1,128)}', space=vmem, size = 0x9000, scoped, tag = 'internal scratch']
  #allocation2 [shape = 'f32[1,1]{1,0:T(1,128)S(1)}', space=vmem, size = 0x200, scoped, tag = 'scoped memory for critic_forward.1']
  %s0 = inlined_call_operand.vmem [shape: f32[8,12], index: 0, kind: input, shape index: {}]
  %s1 = inlined_call_operand.vmem [shape: f32[8,4], index: 1, kind: input, shape index: {}]
  %s2 = inlined_call_operand.hbm [shape: f32[12,128], index: 2, kind: input, shape index: {}]
  %s3 = inlined_call_operand.vmem [shape: f32[4,128], index: 3, kind: input, shape index: {}]
  %s4 = inlined_call_operand.vmem [shape: f32[1,128], index: 4, kind: input, shape index: {}]
  %s5 = inlined_call_operand.hbm [shape: f32[128,128], index: 5, kind: input, shape index: {}]
  %s6 = inlined_call_operand.vmem [shape: f32[1,128], index: 6, kind: input, shape index: {}]
  %s7 = inlined_call_operand.vmem [shape: f32[1,128], index: 7, kind: input, shape index: {}]
  %s8 = inlined_call_operand.<no memory space> [shape: f32[1,1], index: 8, kind: input, shape index: {}]
  %s9 = inlined_call_operand.vmem [shape: f32[8,1], index: 9, kind: output, shape index: {}]
  %s10 = sld [smem:[#allocation0]]
  $region54: #{critic_forward.1} parent=0
    _
  %s12 = ssub.s32 1, %s10
  %s13 = scalar_select 0, %s12, %s10
  %v14 = vstv %s8
  %15 = vst [vmem:[#allocation2] sm:$0x1] %v14
  $region1: #{critic_forward.1} parent=0
    #allocation3 [shape = 'u8[8192]{0}', space=vmem, size = 0x2000, scoped, tag = 'input window, operand 2, single buffered']
    #allocation4 [shape = 's32[1]{0}', space=sflag, size = 0x4, scoped, tag = 'scoped memory for critic_forward.1']
    #allocation5 [shape = 'u8[65536]{0}', space=vmem, size = 0x10000, scoped, tag = 'input window, operand 5, single buffered']
    #allocation6 [shape = 's32[1]{0}', space=sflag, size = 0x4, scoped, tag = 'scoped memory for critic_forward.1']
    %16 = vsyncpa [#allocation4], 0
    %17 = vsyncpa [#allocation6], 0
    // Predicated region
    $region2: #{critic_forward.1} parent=1 // pred_check
      _
    $region3: #{critic_forward.1} parent=1 // pred_check_branch
      %19 = sbr.rel (0) target = $region5
    $region4: #{critic_forward.1} parent=1 // pred_region
      _
    $region5: #{critic_forward.1} parent=1 // pred_fallthru
      _
    // Predicated region
    $region6: #{critic_forward.1} parent=1 // pred_check
      _
    $region7: #{critic_forward.1} parent=1 // pred_check_branch
      %21 = sbr.rel (0) target = $region9
    $region8: #{critic_forward.1} parent=1 // pred_region
      _
    $region9: #{critic_forward.1} parent=1 // pred_fallthru
      _
    // Predicated region
    $region10: #{critic_forward.1} parent=1 // pred_check
      _
    $region11: #{critic_forward.1} parent=1 // pred_check_branch
      %23 = sbr.rel (0) target = $region13
    $region12: #{critic_forward.1} parent=1 // pred_region
      %25 = vsyncadd [#allocation4], 0
      %s26 = sshll.u32 %s2, 4
      %s27 = int_to_ptr.hbm [resolvable:$true] %s26
      %s28 = sshll.u32 [#allocation3], 4
      %s29 = int_to_ptr.vmem [resolvable:$true] %s28
      %34 = dma.hbm_to_vmem [thread:$0]  %s27, 256, %s29, [#allocation4], 128, 128, 8
    $region13: #{critic_forward.1} parent=1 // pred_fallthru
      _
    // Predicated region
    $region14: #{critic_forward.1} parent=1 // pred_check
      _
    $region15: #{critic_forward.1} parent=1 // pred_check_branch
      %36 = sbr.rel (0) target = $region17
    $region16: #{critic_forward.1} parent=1 // pred_region
      _
    $region17: #{critic_forward.1} parent=1 // pred_fallthru
      _
    // Predicated region
    $region18: #{critic_forward.1} parent=1 // pred_check
      _
    $region19: #{critic_forward.1} parent=1 // pred_check_branch
      %38 = sbr.rel (0) target = $region21
    $region20: #{critic_forward.1} parent=1 // pred_region
      _
    $region21: #{critic_forward.1} parent=1 // pred_fallthru
      _
    // Predicated region
    $region22: #{critic_forward.1} parent=1 // pred_check
      _
    $region23: #{critic_forward.1} parent=1 // pred_check_branch
      %40 = sbr.rel (0) target = $region25
    $region24: #{critic_forward.1} parent=1 // pred_region
      %42 = vsyncadd [#allocation6], 0
      %s43 = sshll.u32 %s5, 4
      %s44 = int_to_ptr.hbm [resolvable:$true] %s43
      %s45 = sshll.u32 [#allocation5], 4
      %s46 = int_to_ptr.vmem [resolvable:$true] %s45
      %51 = dma.hbm_to_vmem [thread:$0]  %s44, 2048, %s46, [#allocation6], 128, 128, 8
    $region25: #{critic_forward.1} parent=1 // pred_fallthru
      _
    // Predicated region
    $region26: #{critic_forward.1} parent=1 // pred_check
      _
    $region27: #{critic_forward.1} parent=1 // pred_check_branch
      %53 = sbr.rel (0) target = $region29
    $region28: #{critic_forward.1} parent=1 // pred_region
      _
    $region29: #{critic_forward.1} parent=1 // pred_fallthru
      _
    // Predicated region
    $region30: #{critic_forward.1} parent=1 // pred_check
      _
    $region31: #{critic_forward.1} parent=1 // pred_check_branch
      %55 = sbr.rel (0) target = $region33
    $region32: #{critic_forward.1} parent=1 // pred_region
      _
    $region33: #{critic_forward.1} parent=1 // pred_fallthru
      _
    // Predicated region
    $region34: #{critic_forward.1} parent=1 // pred_check
      _
    $region35: #{critic_forward.1} parent=1 // pred_check_branch
      %57 = sbr.rel (0) target = $region37
    $region36: #{critic_forward.1} parent=1 // pred_region
      _
    $region37: #{critic_forward.1} parent=1 // pred_fallthru
      _
    // Predicated region
    $region38: #{critic_forward.1} parent=1 // pred_check
      _
    $region39: #{critic_forward.1} parent=1 // pred_check_branch
      %59 = sbr.rel (0) target = $region41
    $region40: #{critic_forward.1} parent=1 // pred_region
      %61 = dma.done [#allocation4], 256
    $region41: #{critic_forward.1} parent=1 // pred_fallthru
      _
    // Predicated region
    $region42: #{critic_forward.1} parent=1 // pred_check
      _
    $region43: #{critic_forward.1} parent=1 // pred_check_branch
      %63 = sbr.rel (0) target = $region45
    $region44: #{critic_forward.1} parent=1 // pred_region
      %65 = dma.done [#allocation6], 2048
    $region45: #{critic_forward.1} parent=1 // pred_fallthru
      _
    %v66 = vld [vmem:[%s0] sm:$0xff]
    %v67 = vld [vmem:[#allocation3] sm:$0xff]
    %v68 = vld [vmem:[#allocation3 + $0x8] sm:$0xf]
    %v69 = vld [vmem:[%s1] sm:$0xff]
    %v70 = vld [vmem:[%s3] sm:$0xf]
    %vm71 = vcmask 31744
    %v73 = vsel %vm71, %v69, 0
    %vm75 = vcmask 1043456
    %v77 = vsel %vm75, %v70, 0
    %79 = vmatpush.msra.mxu0 0.0
    %80 = vmatpush.msra.mxu0 0.0
    %81 = vmatpush.msra.mxu0 0.0
    %82 = vmatpush.msra.mxu0 0.0
    %83 = vmatpush.msra.mxu0 0.0
    %84 = vmatpush.msra.mxu0 0.0
    %85 = vmatpush.msra.mxu0 0.0
    %86 = vmatpush.msra.mxu0 0.0
    %87 = vmatpush.msra.mxu0 0.0
    %88 = vmatpush.msra.mxu0 0.0
    %89 = vmatpush.msra.mxu0 0.0
    %90 = vmatpush.msra.mxu0 0.0
    %91 = vmatpush.msra.mxu0 0.0
    %92 = vmatpush.msra.mxu0 0.0
    %93 = vmatpush.msra.mxu0 0.0
    %94 = vmatpush.msra.mxu0 %v77
    %95 = vmatmul.f32.gmra.mxu0 %v73
    %v96 = vpop.f32.mrf.mxu0
    %v97 = vadd.f32 0.0, %v96
    %98 = vdwg.mxu0
    %vm99 = vcmask 97280
    %v101 = vsel %vm99, %v66, 0
    %v104 = vsel %vm75, %v68, 0
    %106 = vmatpush.msra.mxu0 0.0
    %107 = vmatpush.msra.mxu0 0.0
    %108 = vmatpush.msra.mxu0 0.0
    %109 = vmatpush.msra.mxu0 0.0
    %110 = vmatpush.msra.mxu0 0.0
    %111 = vmatpush.msra.mxu0 0.0
    %112 = vmatpush.msra.mxu0 0.0
    %113 = vmatpush.msra.mxu0 0.0
    %114 = vmatpush.msra.mxu0 0.0
    %115 = vmatpush.msra.mxu0 0.0
    %116 = vmatpush.msra.mxu0 0.0
    %117 = vmatpush.msra.mxu0 0.0
    %118 = vmatpush.msra.mxu0 0.0
    %119 = vmatpush.msra.mxu0 0.0
    %120 = vmatpush.msra.mxu0 %v104
    %121 = vmatpush.msra.mxu0 %v67
    %122 = vmatmul.f32.gmra.mxu0 %v101
    %v123 = vpop.f32.mrf.mxu0
    %v124 = vadd.f32 %v97, %v123
    %125 = vdwg.mxu0
    %v126 = vld [vmem:[%s4] sm:$0x1]
    %v128 = vperm.slane %v126, 0
    %v130 = vadd.f32 %v124, %v128
    %v131 = vmax.f32 %v130, 0.0
    %v132 = vld [vmem:[#allocation5] sm:$0xff]
    %v133 = vld [vmem:[#allocation5 + $0x8] sm:$0xff]
    %v134 = vld [vmem:[#allocation5 + $0x10] sm:$0xff]
    %v135 = vld [vmem:[#allocation5 + $0x18] sm:$0xff]
    %v136 = vld [vmem:[#allocation5 + $0x20] sm:$0xff]
    %v137 = vld [vmem:[#allocation5 + $0x28] sm:$0xff]
    %v138 = vld [vmem:[#allocation5 + $0x30] sm:$0xff]
    %v139 = vld [vmem:[#allocation5 + $0x38] sm:$0xff]
    %v140 = vld [vmem:[#allocation5 + $0x40] sm:$0xff]
    %v141 = vld [vmem:[#allocation5 + $0x48] sm:$0xff]
    %v142 = vld [vmem:[#allocation5 + $0x50] sm:$0xff]
    %v143 = vld [vmem:[#allocation5 + $0x58] sm:$0xff]
    %v144 = vld [vmem:[#allocation5 + $0x60] sm:$0xff]
    %v145 = vld [vmem:[#allocation5 + $0x68] sm:$0xff]
    %v146 = vld [vmem:[#allocation5 + $0x70] sm:$0xff]
    %v147 = vld [vmem:[#allocation5 + $0x78] sm:$0xff]
    %v148 = vld [vmem:[%s6] sm:$0x1]
    %v150 = vperm.slane %v148, 0
    %152 = vmatpush.msra.mxu0 %v147
    %153 = vmatpush.msra.mxu0 %v146
    %154 = vmatpush.msra.mxu0 %v145
    %155 = vmatpush.msra.mxu0 %v144
    %156 = vmatpush.msra.mxu0 %v143
    %157 = vmatpush.msra.mxu0 %v142
    %158 = vmatpush.msra.mxu0 %v141
    %159 = vmatpush.msra.mxu0 %v140
    %160 = vmatpush.msra.mxu0 %v139
    %161 = vmatpush.msra.mxu0 %v138
    %162 = vmatpush.msra.mxu0 %v137
    %163 = vmatpush.msra.mxu0 %v136
    %164 = vmatpush.msra.mxu0 %v135
    %165 = vmatpush.msra.mxu0 %v134
    %166 = vmatpush.msra.mxu0 %v133
    %167 = vmatpush.msra.mxu0 %v132
    %168 = vmatmul.f32.gmra.mxu0 %v131
    %v169 = vpop.f32.mrf.mxu0
    %v170 = vadd.f32 %v150, %v169
    %171 = vdwg.mxu0
    %v172 = vmax.f32 %v170, 0.0
    %v173 = vld [vmem:[%s7] sm:$0x1]
    %v175 = vperm.slane %v173, 0
    %v177 = vmul.f32 %v172, %v175
    %178 = vadd.xlane.f32.xlu0 %v177
    %v179 = vpop.xlane.xlu0 %178
    %v180 = vld [vmem:[#allocation2] sm:$0x1]
    %v182 = vperm.slane %v180, 0
    %v184 = vadd.f32 %v179, %v182
    %vm185 = vcmask 7168
    %186 = vst.msk [vmem:[%s9] sm:$0xff] %vm185, %v184
    // Predicated region
    $region46: #{critic_forward.1} parent=1 // pred_check
      _
    $region47: #{critic_forward.1} parent=1 // pred_check_branch
      %188 = sbr.rel (0) target = $region49
    $region48: #{critic_forward.1} parent=1 // pred_region
      _
    $region49: #{critic_forward.1} parent=1 // pred_fallthru
      _
    // Predicated region
    $region50: #{critic_forward.1} parent=1 // pred_check
      _
    $region51: #{critic_forward.1} parent=1 // pred_check_branch
      %190 = sbr.rel (0) target = $region53
    $region52: #{critic_forward.1} parent=1 // pred_region
      _
    $region53: #{critic_forward.1} parent=1 // pred_fallthru
      _
    %191 = vsyncpa [#allocation4], 1
    %192 = vsyncpa [#allocation6], 1

</llo_original>
